<compile_context>
chip_gen: v6e
topology: v6e:2x2x1
jax: 0.10.0
libtpu: 0.0.40
codegen_flags: <defaults>
</compile_context>

<pallas_src>
import functools

import jax
import jax.numpy as jnp
from jax import lax
from jax.experimental import pallas as pl
from jax.experimental.pallas import tpu as pltpu


_NEG_LARGE = -1e30  # finite large-negative mask fill (no NaN on fully-masked rows)


def _sdpa_kernel(*refs, inv_temp, has_mask, return_attn):
    q_ref, k_ref, v_ref = refs[0], refs[1], refs[2]
    idx = 3
    mask_ref = None
    if has_mask:
        mask_ref = refs[idx]
        idx += 1
    out_ref = refs[idx]
    idx += 1
    attn_ref = refs[idx] if return_attn else None

    k = k_ref[0]                       # (Lk, Dq)
    v = v_ref[0]                       # (Lk, Dv)
    # Scale q by 1/temperature in f32 (cheaper than scaling the (tq, Lk) score tile
    # when Lk >> Dq), then cast back to the MXU operand dtype (bf16 path for bf16 in).
    q = (q_ref[0].astype(jnp.float32) * inv_temp).astype(k.dtype)   # (tq, Dq)

    # q @ k^T without materializing a transpose: contract the D axis of both operands.
    s = lax.dot_general(
        q, k, (((1,), (1,)), ((), ())),
        preferred_element_type=jnp.float32,
    )                                  # (tq, Lk) f32

    if has_mask:
        # int8 mask read straight from HBM; select is a free VALU op under the MXU.
        s = jnp.where(mask_ref[0] != 0, jnp.float32(_NEG_LARGE), s)

    # Numerically stable softmax over Lk.
    s_max = jnp.max(s, axis=-1, keepdims=True)
    e = jnp.exp(s - s_max)
    denom = jnp.sum(e, axis=-1, keepdims=True)
    attn = e * pl.reciprocal(denom, approx=False)   # multiply instead of divide

    if return_attn:
        attn_ref[0] = attn.astype(attn_ref.dtype)

    # Second matmul on the MXU; attn cast to v.dtype (bf16 path), f32 accumulation.
    out_ref[0] = jnp.dot(
        attn.astype(v.dtype), v, preferred_element_type=jnp.float32
    ).astype(out_ref.dtype)


def _vmem_capacity_bytes():
    try:
        return int(pltpu.get_tpu_info().vmem_capacity_bytes)
    except Exception:
        return 64 * 1024 * 1024  # conservative: v7x per-TC physical VMEM


def _per_step_vmem_bytes(tq, lk, dq, dv, itemsize, attn_itemsize, has_mask, return_attn):
    # Tiled (per-grid-step) operands, double-buffered by the Pallas pipeline.
    tiled = tq * dq * itemsize                 # q tile
    tiled += tq * dv * itemsize                # out tile
    if has_mask:
        tiled += tq * lk                       # int8 mask tile
    if return_attn:
        tiled += tq * lk * attn_itemsize       # attn tile
    resident = lk * (dq + dv) * itemsize       # K + V resident per batch
    total = 2 * (tiled + resident)             # double buffering
    total += 2 * tq * lk * 4                   # f32 score / exp live values
    return total


def _choose_tq(lq, lk, dq, dv, itemsize, attn_itemsize, has_mask, return_attn, budget):
    # tq must be a multiple of 32 (int8 mask sublane tiling) or the full Lq extent.
    candidates = [t for t in (1024, 512, 256, 128, 64, 32) if t <= lq and lq % t == 0]
    for tq in candidates:
        if _per_step_vmem_bytes(tq, lk, dq, dv, itemsize, attn_itemsize,
                                has_mask, return_attn) <= budget:
            return tq
    if candidates:
        return candidates[-1]
    return lq  # full extent is always layout-legal


def scaled_dot_product_attention(q, k, v, temperature, mask=None,
                                 return_attn=True, attn_dtype=None):
    """q: (B, Lq, Dq), k: (B, Lk, Dq), v: (B, Lk, Dv), mask: (B, Lq, Lk) bool/int or None.

    Returns (output (B, Lq, Dv), attn (B, Lq, Lk)) if return_attn else output only.
    """
    B, Lq, Dq = q.shape
    Bk, Lk, Dk = k.shape
    Bv, Lv, Dv = v.shape
    assert Lk == Lv and Dq == Dk and B == Bk == Bv

    inv_temp = 1.0 / float(temperature)
    has_mask = mask is not None
    itemsize = jnp.dtype(q.dtype).itemsize
    attn_dtype = q.dtype if attn_dtype is None else jnp.dtype(attn_dtype)
    attn_itemsize = jnp.dtype(attn_dtype).itemsize

    # Generation-aware VMEM budgeting (v7x: 64 MiB physical, v5e/v6e: 128 MiB).
    cap = _vmem_capacity_bytes()
    budget = max(cap // 2 - (4 << 20), 8 << 20)
    tq = _choose_tq(Lq, Lk, Dq, Dv, itemsize, attn_itemsize, has_mask, return_attn, budget)
    nq = Lq // tq
    grid = (B, nq)
    est_bytes = _per_step_vmem_bytes(tq, Lk, Dq, Dv, itemsize, attn_itemsize,
                                     has_mask, return_attn)
    vmem_limit = int(min(cap - (4 << 20), max(2 * est_bytes, 32 << 20)))

    in_specs = [
        pl.BlockSpec((1, tq, Dq), lambda b, i: (b, i, 0)),   # q: tiled on Lq
        pl.BlockSpec((1, Lk, Dq), lambda b, i: (b, 0, 0)),   # k: resident per batch
        pl.BlockSpec((1, Lk, Dv), lambda b, i: (b, 0, 0)),   # v: resident per batch
    ]
    operands = [q, k, v]

    if has_mask:
        # 1 byte/elem straight into the kernel — no bf16 bias materialization pass.
        mask_i8 = mask if mask.dtype == jnp.int8 else mask.astype(jnp.int8)
        in_specs.append(pl.BlockSpec((1, tq, Lk), lambda b, i: (b, i, 0)))
        operands.append(mask_i8)

    out_spec_o = pl.BlockSpec((1, tq, Dv), lambda b, i: (b, i, 0))
    if return_attn:
        out_shape = (
            jax.ShapeDtypeStruct((B, Lq, Dv), q.dtype),
            jax.ShapeDtypeStruct((B, Lq, Lk), attn_dtype),
        )
        out_specs = [out_spec_o, pl.BlockSpec((1, tq, Lk), lambda b, i: (b, i, 0))]
    else:
        out_shape = jax.ShapeDtypeStruct((B, Lq, Dv), q.dtype)
        out_specs = out_spec_o

    kernel = functools.partial(
        _sdpa_kernel, inv_temp=inv_temp, has_mask=has_mask, return_attn=return_attn
    )

    grid_spec = pltpu.PrefetchScalarGridSpec(
        num_scalar_prefetch=0,
        grid=grid,
        in_specs=in_specs,
        out_specs=out_specs,
    )

    # Advisory cost for XLA's scheduler.
    flops = 2 * B * Lq * Lk * (Dq + Dv)
    transcendentals = B * Lq * Lk
    bytes_accessed = sum(int(x.size) * jnp.dtype(x.dtype).itemsize for x in operands)
    bytes_accessed += B * Lq * Dv * itemsize
    if return_attn:
        bytes_accessed += B * Lq * Lk * attn_itemsize
    cost = pl.CostEstimate(flops=int(flops), transcendentals=int(transcendentals),
                           bytes_accessed=int(bytes_accessed))

    return pl.pallas_call(
        kernel,
        out_shape=out_shape,
        grid_spec=grid_spec,
        cost_estimate=cost,
        compiler_params=pltpu.CompilerParams(
            dimension_semantics=("parallel", "parallel"),
            vmem_limit_bytes=vmem_limit,
        ),
    )(*operands)


def _reference(q, k, v, temperature, mask=None):
    attn = jnp.einsum("bqd,bkd->bqk", q, k) / temperature
    if mask is not None:
        attn = jnp.where(mask, -jnp.inf, attn)
    attn = jax.nn.softmax(attn, axis=2)
    out = jnp.einsum("bqk,bkd->bqd", attn, v)
    return out, attn


if __name__ == "__main__":
    key = jax.random.PRNGKey(0)
    B, Lq, Lk, Dq, Dv = 2, 8, 8, 32, 32
    temperature = float(Dq) ** 0.5

    kq, kk, kv, km = jax.random.split(key, 4)
    q = jax.random.normal(kq, (B, Lq, Dq), dtype=jnp.float32)
    k = jax.random.normal(kk, (B, Lk, Dq), dtype=jnp.float32)
    v = jax.random.normal(kv, (B, Lk, Dv), dtype=jnp.float32)
    # deterministic partial mask (never masks an entire row)
    mask = jax.random.bernoulli(km, p=0.2, shape=(B, Lq, Lk))
    mask = mask.at[:, :, 0].set(False)

    # masked path (f32: exact-precision matmuls, 1e-5 parity with the reference)
    out, attn = scaled_dot_product_attention(q, k, v, temperature, mask)
    out = jax.block_until_ready(out)
    attn = jax.block_until_ready(attn)
    ref_out, ref_attn = _reference(q, k, v, temperature, mask)
    assert jnp.allclose(out, ref_out, atol=1e-5, rtol=1e-5)
    assert jnp.allclose(attn, ref_attn, atol=1e-5, rtol=1e-5)

    # mask=None path (compiles a variant with no mask operand)
    out2, attn2 = scaled_dot_product_attention(q, k, v, temperature, None)
    jax.block_until_ready(out2)
    ref_out2, ref_attn2 = _reference(q, k, v, temperature, None)
    assert jnp.allclose(out2, ref_out2, atol=1e-5, rtol=1e-5)
    assert jnp.allclose(attn2, ref_attn2, atol=1e-5, rtol=1e-5)

    # output-only path (drops the attn writeback entirely)
    out3 = scaled_dot_product_attention(q, k, v, temperature, mask, return_attn=False)
    jax.block_until_ready(out3)
    assert jnp.allclose(out3, ref_out, atol=1e-5, rtol=1e-5)

    # bf16 path: both matmuls run the bf16 MXU with f32 accumulation (loose tolerance)
    qb, kb, vb = (x.astype(jnp.bfloat16) for x in (q, k, v))
    out4, attn4 = scaled_dot_product_attention(qb, kb, vb, temperature, mask)
    out4 = jax.block_until_ready(out4)
    ref_out4, ref_attn4 = _reference(qb.astype(jnp.float32), kb.astype(jnp.float32),
                                     vb.astype(jnp.float32), temperature, mask)
    assert jnp.allclose(out4.astype(jnp.float32), ref_out4, atol=0.1, rtol=0.1)
    assert jnp.allclose(attn4.astype(jnp.float32), ref_attn4, atol=0.1, rtol=0.1)

    print("KERNEL_OK")
</pallas_src>

<mosaic_0001>
module attributes {stable_mosaic.version = 11 : i64} {
  func.func @_sdpa_kernel(%arg0: i32, %arg1: i32, %arg2: memref<1x8x32xf32, #tpu.memory_space<vmem>>, %arg3: memref<1x8x32xf32, #tpu.memory_space<vmem>>, %arg4: memref<1x8x32xf32, #tpu.memory_space<vmem>>, %arg5: memref<1x8x8xi8, #tpu.memory_space<vmem>>, %arg6: memref<1x8x32xf32, #tpu.memory_space<vmem>>, %arg7: memref<1x8x8xf32, #tpu.memory_space<vmem>>) attributes {dimension_semantics = [#tpu.dimension_semantics<parallel>, #tpu.dimension_semantics<parallel>], iteration_bounds = array<i64: 2, 1>, scalar_prefetch = 0 : i64, scratch_operands = 0 : i64, tpu.core_type = #tpu.core_type<tc>, window_params = [{transform_indices = @transform_0, window_bounds = array<i64: 1, 8, 32>}, {transform_indices = @transform_1, window_bounds = array<i64: 1, 8, 32>}, {transform_indices = @transform_2, window_bounds = array<i64: 1, 8, 32>}, {transform_indices = @transform_3, window_bounds = array<i64: 1, 8, 8>}, {transform_indices = @transform_4, window_bounds = array<i64: 1, 8, 32>}, {transform_indices = @transform_5, window_bounds = array<i64: 1, 8, 8>}]} {
    %c0 = arith.constant 0 : index
    %c0_0 = arith.constant 0 : index
    %c0_1 = arith.constant 0 : index
    %0 = vector.load %arg3[%c0, %c0_0, %c0_1] : memref<1x8x32xf32, #tpu.memory_space<vmem>>, vector<1x8x32xf32>
    %1 = vector.shape_cast %0 : vector<1x8x32xf32> to vector<8x32xf32>
    %c0_2 = arith.constant 0 : index
    %c0_3 = arith.constant 0 : index
    %c0_4 = arith.constant 0 : index
    %2 = vector.load %arg4[%c0_2, %c0_3, %c0_4] : memref<1x8x32xf32, #tpu.memory_space<vmem>>, vector<1x8x32xf32>
    %3 = vector.shape_cast %2 : vector<1x8x32xf32> to vector<8x32xf32>
    %c0_5 = arith.constant 0 : index
    %c0_6 = arith.constant 0 : index
    %c0_7 = arith.constant 0 : index
    %4 = vector.load %arg2[%c0_5, %c0_6, %c0_7] : memref<1x8x32xf32, #tpu.memory_space<vmem>>, vector<1x8x32xf32>
    %5 = vector.shape_cast %4 : vector<1x8x32xf32> to vector<8x32xf32>
    %cst = arith.constant 0.176776692 : f32
    %6 = vector.broadcast %cst : f32 to vector<8x32xf32>
    %7 = arith.mulf %5, %6 : vector<8x32xf32>
    %cst_8 = arith.constant dense<0.000000e+00> : vector<8x8xf32>
    %8 = tpu.matmul %7, %1, %cst_8 {dimension_numbers = #tpu.dot_dimension_numbers<[1], [1], [0], [0], [0, 0, 1, 0], [], []>} : vector<8x32xf32>, vector<8x32xf32>, vector<8x8xf32> -> vector<8x8xf32>
    %c0_9 = arith.constant 0 : index
    %c0_10 = arith.constant 0 : index
    %c0_11 = arith.constant 0 : index
    %9 = vector.load %arg5[%c0_9, %c0_10, %c0_11] : memref<1x8x8xi8, #tpu.memory_space<vmem>>, vector<1x8x8xi8>
    %10 = vector.shape_cast %9 : vector<1x8x8xi8> to vector<8x8xi8>
    %c0_i8 = arith.constant 0 : i8
    %11 = vector.broadcast %c0_i8 : i8 to vector<8x8xi8>
    %12 = arith.cmpi ne, %10, %11 : vector<8x8xi8>
    %cst_12 = arith.constant -1.000000e+30 : f32
    %13 = vector.broadcast %cst_12 : f32 to vector<8x8xf32>
    %14 = arith.select %12, %13, %8 : vector<8x8xi1>, vector<8x8xf32>
    %cst_13 = arith.constant dense<0xFF800000> : vector<8xf32>
    %15 = vector.multi_reduction <maximumf>, %14, %cst_13 [1] : vector<8x8xf32> to vector<8xf32>
    %16 = vector.shape_cast %15 : vector<8xf32> to vector<8x1xf32>
    %17 = vector.broadcast %16 : vector<8x1xf32> to vector<8x8xf32>
    %18 = arith.subf %14, %17 : vector<8x8xf32>
    %19 = math.exp %18 : vector<8x8xf32>
    %cst_14 = arith.constant dense<0.000000e+00> : vector<8xf32>
    %20 = vector.multi_reduction <add>, %19, %cst_14 [1] : vector<8x8xf32> to vector<8xf32>
    %21 = vector.shape_cast %20 : vector<8xf32> to vector<8x1xf32>
    %22 = tpu.reciprocal %21 : vector<8x1xf32> -> vector<8x1xf32>
    %23 = vector.broadcast %22 : vector<8x1xf32> to vector<8x8xf32>
    %24 = arith.mulf %19, %23 : vector<8x8xf32>
    %c0_15 = arith.constant 0 : index
    %c0_16 = arith.constant 0 : index
    %c0_17 = arith.constant 0 : index
    %25 = vector.load %arg7[%c0_15, %c0_16, %c0_17] : memref<1x8x8xf32, #tpu.memory_space<vmem>>, vector<1x8x8xf32>
    %26 = vector.shape_cast %25 : vector<1x8x8xf32> to vector<8x8xf32>
    %27 = vector.shape_cast %24 : vector<8x8xf32> to vector<1x8x8xf32>
    tpu.vector_store %arg7[%c0_15, %c0_16, %c0_17], %27 {strides = array<i32>} : memref<1x8x8xf32, #tpu.memory_space<vmem>>, vector<1x8x8xf32>,
    %cst_18 = arith.constant dense<0.000000e+00> : vector<8x32xf32>
    %28 = tpu.matmul %24, %3, %cst_18 {dimension_numbers = #tpu.dot_dimension_numbers<[1], [0], [0], [1], [0, 0, 1, 1], [], []>} : vector<8x8xf32>, vector<8x32xf32>, vector<8x32xf32> -> vector<8x32xf32>
    %c0_19 = arith.constant 0 : index
    %c0_20 = arith.constant 0 : index
    %c0_21 = arith.constant 0 : index
    %29 = vector.load %arg6[%c0_19, %c0_20, %c0_21] : memref<1x8x32xf32, #tpu.memory_space<vmem>>, vector<1x8x32xf32>
    %30 = vector.shape_cast %29 : vector<1x8x32xf32> to vector<8x32xf32>
    %31 = vector.shape_cast %28 : vector<8x32xf32> to vector<1x8x32xf32>
    tpu.vector_store %arg6[%c0_19, %c0_20, %c0_21], %31 {strides = array<i32>} : memref<1x8x32xf32, #tpu.memory_space<vmem>>, vector<1x8x32xf32>,
    return
  }
  func.func @transform_0(%arg0: i32, %arg1: i32) -> (i32, i32, i32) {
    %c0_i32 = arith.constant 0 : i32
    %c0_i32_0 = arith.constant 0 : i32
    return %arg0, %arg1, %c0_i32 : i32, i32, i32
  }
  func.func @transform_1(%arg0: i32, %arg1: i32) -> (i32, i32, i32) {
    %c0_i32 = arith.constant 0 : i32
    %c0_i32_0 = arith.constant 0 : i32
    %c0_i32_1 = arith.constant 0 : i32
    return %arg0, %c0_i32, %c0_i32_0 : i32, i32, i32
  }
  func.func @transform_2(%arg0: i32, %arg1: i32) -> (i32, i32, i32) {
    %c0_i32 = arith.constant 0 : i32
    %c0_i32_0 = arith.constant 0 : i32
    %c0_i32_1 = arith.constant 0 : i32
    return %arg0, %c0_i32, %c0_i32_0 : i32, i32, i32
  }
  func.func @transform_3(%arg0: i32, %arg1: i32) -> (i32, i32, i32) {
    %c0_i32 = arith.constant 0 : i32
    %c0_i32_0 = arith.constant 0 : i32
    return %arg0, %arg1, %c0_i32 : i32, i32, i32
  }
  func.func @transform_4(%arg0: i32, %arg1: i32) -> (i32, i32, i32) {
    %c0_i32 = arith.constant 0 : i32
    %c0_i32_0 = arith.constant 0 : i32
    return %arg0, %arg1, %c0_i32 : i32, i32, i32
  }
  func.func @transform_5(%arg0: i32, %arg1: i32) -> (i32, i32, i32) {
    %c0_i32 = arith.constant 0 : i32
    %c0_i32_0 = arith.constant 0 : i32
    return %arg0, %arg1, %c0_i32 : i32, i32, i32
  }
}

</mosaic_0001>

<llo_original>
// kernel: tpu_custom_call.1
$region0: #{tpu_custom_call.1}
  #allocation0 [shape = 'u32[]', space=smem, size = 0x4, offset = 0x4, fixed_abs, tag = 'smem constant byte address 0x4 - core index']
  #allocation1 [shape = 'u32[144,128]{1,0:T(1,128)}', space=vmem, size = 0x12000, scoped, tag = 'internal scratch']
  %s0 = inlined_call_operand.hbm [shape: f32[2,8,32], index: 0, kind: input, shape index: {}]
  %s1 = inlined_call_operand.hbm [shape: f32[2,8,32], index: 1, kind: input, shape index: {}]
  %s2 = inlined_call_operand.hbm [shape: f32[2,8,32], index: 2, kind: input, shape index: {}]
  %s3 = inlined_call_operand.vmem [shape: s8[2,8,8], index: 3, kind: input, shape index: {}]
  %s4 = inlined_call_operand.hbm [shape: f32[2,8,32], index: 4, kind: output, shape index: {0}]
  %s5 = inlined_call_operand.hbm [shape: f32[2,8,8], index: 5, kind: output, shape index: {1}]
  %6 = xla_tuple %s4, %s5
  %s7 = sld [smem:[#allocation0]]
  $region69: #{tpu_custom_call.1} parent=0
    _
  %s9 = ssub.s32 1, %s7
  %s10 = scalar_select 0, %s9, %s7
  $region1: #{tpu_custom_call.1} parent=0
    #allocation2 [shape = 'u8[8192]{0}', space=vmem, size = 0x2000, scoped, tag = 'input window, operand 0']
    #allocation3 [shape = 's32[2]{0}', space=sflag, size = 0x8, scoped, tag = 'scoped memory for tpu_custom_call.1']
    #allocation4 [shape = 's32[2]{0}', space=sflag, size = 0x8, scoped, tag = 'scoped memory for tpu_custom_call.1']
    #allocation5 [shape = 'u8[8192]{0}', space=vmem, size = 0x2000, scoped, tag = 'input window, operand 1']
    #allocation6 [shape = 's32[2]{0}', space=sflag, size = 0x8, scoped, tag = 'scoped memory for tpu_custom_call.1']
    #allocation7 [shape = 'u8[8192]{0}', space=vmem, size = 0x2000, scoped, tag = 'input window, operand 2']
    #allocation8 [shape = 'u8[8192]{0}', space=vmem, size = 0x2000, scoped, tag = 'output window, operand 0']
    #allocation9 [shape = 'u8[8192]{0}', space=vmem, size = 0x2000, scoped, tag = 'output window, operand 1']
    #allocation10 [shape = 's32[2]{0}', space=sflag, size = 0x8, scoped, tag = 'scoped memory for tpu_custom_call.1']
    %11 = vsyncpa [#allocation3], 0
    %s12 = scalar_lea.sflag [#allocation3], 1
    %13 = vsyncpa %s12, 0
    %14 = vsyncpa [#allocation6], 0
    %s15 = scalar_lea.sflag [#allocation6], 1
    %16 = vsyncpa %s15, 0
    %17 = vsyncpa [#allocation4], 0
    %s18 = scalar_lea.sflag [#allocation4], 1
    %19 = vsyncpa %s18, 0
    %20 = vsyncpa [#allocation10], 0
    %s21 = scalar_lea.sflag [#allocation10], 1
    %22 = vsyncpa %s21, 0
    loop: start=0, step=1, limit=4
    $region2: #{tpu_custom_call.1} parent=1 // loop_pre_header
      _
    $region3: #{tpu_custom_call.1} parent=1 // loop_header
      %s24 = sphi 0, %s28
      %p25 = scmp.ge.s32.totalorder %s24, 4
      %s31 = sphi 0, %s43
      %s32 = sphi 0, %s39
      %s33 = sphi 0, %s31
      %s34 = sphi 0, %s32
      %s35 = sphi 0, %s33
      %s36 = sphi 0, %s34
      %s48 = sphi 0, %s50
      %s51 = sphi 0, %s48
      %s52 = sphi 0, %s51
      %s68 = sphi 0, %s52
      %s74 = sphi 0, %s76
      %s77 = sphi 0, %s74
      %s78 = sphi 0, %s77
      %s94 = sphi 0, %s78
      %s100 = sphi 0, %s102
      %s103 = sphi 0, %s100
      %s104 = sphi 0, %s103
      %s120 = sphi 0, %s104
      %s128 = sphi 0, %s130
      %s131 = sphi 0, %s128
      %s132 = sphi 0, %s131
      %s148 = sphi 0, %s132
      %s156 = sphi 0, %s158
      %s159 = sphi 0, %s156
      %s160 = sphi 0, %s159
      %s176 = sphi 0, %s160
      %s184 = sphi 0, %s186
      %s187 = sphi 0, %s184
      %s188 = sphi 0, %s187
      %s204 = sphi 0, %s188
    $region4: #{tpu_custom_call.1} parent=1 // loop_header_branch
      %27 = sbr.rel (%p25) target = $region8
    $region5: #{tpu_custom_call.1} parent=1 // loop_body
      %s29 = ssub.s32 %s24, 1
      %s30 = ssub.s32 %s24, 2
      %s37 = sadd.s32 1, %s32
      %p38 = scmp.ge.s32.totalorder %s37, 1
      %s39 = scalar_select %p38, 0, %s37
      %s40 = sadd.s32 1, %s31
      %s41 = scalar_select %p38, %s40, %s31
      %p42 = scmp.ge.s32.totalorder %s41, 2
      %s43 = scalar_select %p42, 0, %s41
      %s44 = ssub.s32 %s31, %s43
      %s45 = ssub.s32 %s32, %s39
      %s46 = sor.u32 %s44, %s45
      %p47 = scmp.eq.s32.totalorder %s46, 0
      %s49 = sadd.s32 %s48, 1
      %s50 = scalar_select %p47, %s48, %s49
      %p53 = pneg %p47
      %p54 = scmp.eq.s32.totalorder %s24, 1
      %p55 = por %p53, %p54
      %p56 = scmp.ne.s32.totalorder %s48, %s51
      %p57 = scmp.eq.s32.totalorder %s24, 0
      %p58 = por %p56, %p57
      %p59 = scmp.ne.s32.totalorder %s48, %s51
      %p60 = scmp.eq.s32.totalorder %s29, 1
      %p61 = por %p59, %p60
      %p62 = scmp.ne.s32.totalorder %s51, %s52
      %p63 = scmp.eq.s32.totalorder %s29, 0
      %p64 = por %p62, %p63
      %p65 = scmp.ne.s32.totalorder %s51, %s52
      %p66 = scmp.eq.s32.totalorder %s30, 1
      %p67 = por %p65, %p66
      %p69 = scmp.ne.s32.totalorder %s52, %s68
      %p70 = scmp.eq.s32.totalorder %s30, 0
      %p71 = por %p69, %p70
      %s72 = ssub.s32 %s31, %s43
      %p73 = scmp.eq.s32.totalorder %s72, 0
      %s75 = sadd.s32 %s74, 1
      %s76 = scalar_select %p73, %s74, %s75
      %p79 = pneg %p73
      %p80 = scmp.eq.s32.totalorder %s24, 1
      %p81 = por %p79, %p80
      %p82 = scmp.ne.s32.totalorder %s74, %s77
      %p83 = scmp.eq.s32.totalorder %s24, 0
      %p84 = por %p82, %p83
      %p85 = scmp.ne.s32.totalorder %s74, %s77
      %p86 = scmp.eq.s32.totalorder %s29, 1
      %p87 = por %p85, %p86
      %p88 = scmp.ne.s32.totalorder %s77, %s78
      %p89 = scmp.eq.s32.totalorder %s29, 0
      %p90 = por %p88, %p89
      %p91 = scmp.ne.s32.totalorder %s77, %s78
      %p92 = scmp.eq.s32.totalorder %s30, 1
      %p93 = por %p91, %p92
      %p95 = scmp.ne.s32.totalorder %s78, %s94
      %p96 = scmp.eq.s32.totalorder %s30, 0
      %p97 = por %p95, %p96
      %s98 = ssub.s32 %s31, %s43
      %p99 = scmp.eq.s32.totalorder %s98, 0
      %s101 = sadd.s32 %s100, 1
      %s102 = scalar_select %p99, %s100, %s101
      %p105 = pneg %p99
      %p106 = scmp.eq.s32.totalorder %s24, 1
      %p107 = por %p105, %p106
      %p108 = scmp.ne.s32.totalorder %s100, %s103
      %p109 = scmp.eq.s32.totalorder %s24, 0
      %p110 = por %p108, %p109
      %p111 = scmp.ne.s32.totalorder %s100, %s103
      %p112 = scmp.eq.s32.totalorder %s29, 1
      %p113 = por %p111, %p112
      %p114 = scmp.ne.s32.totalorder %s103, %s104
      %p115 = scmp.eq.s32.totalorder %s29, 0
      %p116 = por %p114, %p115
      %p117 = scmp.ne.s32.totalorder %s103, %s104
      %p118 = scmp.eq.s32.totalorder %s30, 1
      %p119 = por %p117, %p118
      %p121 = scmp.ne.s32.totalorder %s104, %s120
      %p122 = scmp.eq.s32.totalorder %s30, 0
      %p123 = por %p121, %p122
      %s124 = ssub.s32 %s31, %s43
      %s125 = ssub.s32 %s32, %s39
      %s126 = sor.u32 %s124, %s125
      %p127 = scmp.eq.s32.totalorder %s126, 0
      %s129 = sadd.s32 %s128, 1
      %s130 = scalar_select %p127, %s128, %s129
      %p133 = pneg %p127
      %p134 = scmp.eq.s32.totalorder %s24, 1
      %p135 = por %p133, %p134
      %p136 = scmp.ne.s32.totalorder %s128, %s131
      %p137 = scmp.eq.s32.totalorder %s24, 0
      %p138 = por %p136, %p137
      %p139 = scmp.ne.s32.totalorder %s128, %s131
      %p140 = scmp.eq.s32.totalorder %s29, 1
      %p141 = por %p139, %p140
      %p142 = scmp.ne.s32.totalorder %s131, %s132
      %p143 = scmp.eq.s32.totalorder %s29, 0
      %p144 = por %p142, %p143
      %p145 = scmp.ne.s32.totalorder %s131, %s132
      %p146 = scmp.eq.s32.totalorder %s30, 1
      %p147 = por %p145, %p146
      %p149 = scmp.ne.s32.totalorder %s132, %s148
      %p150 = scmp.eq.s32.totalorder %s30, 0
      %p151 = por %p149, %p150
      %s152 = ssub.s32 %s31, %s43
      %s153 = ssub.s32 %s32, %s39
      %s154 = sor.u32 %s152, %s153
      %p155 = scmp.eq.s32.totalorder %s154, 0
      %s157 = sadd.s32 %s156, 1
      %s158 = scalar_select %p155, %s156, %s157
      %p161 = pneg %p155
      %p162 = scmp.eq.s32.totalorder %s24, 1
      %p163 = por %p161, %p162
      %p164 = scmp.ne.s32.totalorder %s156, %s159
      %p165 = scmp.eq.s32.totalorder %s24, 0
      %p166 = por %p164, %p165
      %p167 = scmp.ne.s32.totalorder %s156, %s159
      %p168 = scmp.eq.s32.totalorder %s29, 1
      %p169 = por %p167, %p168
      %p170 = scmp.ne.s32.totalorder %s159, %s160
      %p171 = scmp.eq.s32.totalorder %s29, 0
      %p172 = por %p170, %p171
      %p173 = scmp.ne.s32.totalorder %s159, %s160
      %p174 = scmp.eq.s32.totalorder %s30, 1
      %p175 = por %p173, %p174
      %p177 = scmp.ne.s32.totalorder %s160, %s176
      %p178 = scmp.eq.s32.totalorder %s30, 0
      %p179 = por %p177, %p178
      %s180 = ssub.s32 %s31, %s43
      %s181 = ssub.s32 %s32, %s39
      %s182 = sor.u32 %s180, %s181
      %p183 = scmp.eq.s32.totalorder %s182, 0
      %s185 = sadd.s32 %s184, 1
      %s186 = scalar_select %p183, %s184, %s185
      %p189 = pneg %p183
      %p190 = scmp.eq.s32.totalorder %s24, 1
      %p191 = por %p189, %p190
      %p192 = scmp.ne.s32.totalorder %s184, %s187
      %p193 = scmp.eq.s32.totalorder %s24, 0
      %p194 = por %p192, %p193
      %p195 = scmp.ne.s32.totalorder %s184, %s187
      %p196 = scmp.eq.s32.totalorder %s29, 1
      %p197 = por %p195, %p196
      %p198 = scmp.ne.s32.totalorder %s187, %s188
      %p199 = scmp.eq.s32.totalorder %s29, 0
      %p200 = por %p198, %p199
      %p201 = scmp.ne.s32.totalorder %s187, %s188
      %p202 = scmp.eq.s32.totalorder %s30, 1
      %p203 = por %p201, %p202
      %p205 = scmp.ne.s32.totalorder %s188, %s204
      %p206 = scmp.eq.s32.totalorder %s30, 0
      %p207 = por %p205, %p206
      %p208 = scmp.le.s32.totalorder 1, %s24
      %p209 = scmp.lt.s32.totalorder %s24, 3
      %p210 = pnand %p208, %p209
      %p211 = pneg %p210
      // Predicated region
      $region9: #{tpu_custom_call.1} parent=5 // pred_check
        _
      $region10: #{tpu_custom_call.1} parent=5 // pred_check_branch
        %213 = sbr.rel (%p210) target = $region12
      $region11: #{tpu_custom_call.1} parent=5 // pred_region
        %s214 = ssub.s32 %s24, 1
      $region12: #{tpu_custom_call.1} parent=5 // pred_fallthru
        _
      %p215 = scmp.lt.s32.totalorder %s24, 2
      // Predicated region
      $region13: #{tpu_custom_call.1} parent=5 // pred_check
        %p216 = pneg %p215
      $region14: #{tpu_custom_call.1} parent=5 // pred_check_branch
        %218 = sbr.rel (%p216) target = $region16
      $region15: #{tpu_custom_call.1} parent=5 // pred_region
        // Predicated region
        $region17: #{tpu_custom_call.1} parent=15 // pred_check
          %p219 = pneg %p58
        $region18: #{tpu_custom_call.1} parent=15 // pred_check_branch
          %221 = sbr.rel (%p219) target = $region20
        $region19: #{tpu_custom_call.1} parent=15 // pred_region
          %s222 = sand.u32 %s48, 1
          %s223 = scalar_lea.sflag [#allocation3], %s222
          %s224 = sand.u32 %s48, 1
          %s225 = smul.addr %s224, 8
          %s226 = scalar_lea.vmem [#allocation2], %s225
          %s228 = ssub.s32 128, 128
          %229 = vsyncadd %s223, %s228
          %s230 = sadd.s32 %s32, %s31
          %s231 = smul.addr %s230, 128
          %s232 = scalar_lea.hbm %s0, %s231
          %s234 = sshll.u32 %s226, 4
          %s235 = int_to_ptr.vmem [resolvable:$true] %s234
          %237 = dma.hbm_to_vmem [thread:$0]  %s232, 128, %s235, %s223
        $region20: #{tpu_custom_call.1} parent=15 // pred_fallthru
          _
        // Predicated region
        $region21: #{tpu_custom_call.1} parent=15 // pred_check
          %p238 = pneg %p84
        $region22: #{tpu_custom_call.1} parent=15 // pred_check_branch
          %240 = sbr.rel (%p238) target = $region24
        $region23: #{tpu_custom_call.1} parent=15 // pred_region
          %s241 = sand.u32 %s24, 1
          %s242 = scalar_lea.sflag [#allocation6], %s241
          %s243 = sand.u32 %s74, 1
          %s244 = smul.addr %s243, 8
          %s245 = scalar_lea.vmem [#allocation5], %s244
          %s247 = ssub.s32 128, 128
          %248 = vsyncadd %s242, %s247
          %s249 = smul.addr %s31, 128
          %s250 = scalar_lea.hbm %s1, %s249
          %s252 = sshll.u32 %s245, 4
          %s253 = int_to_ptr.vmem [resolvable:$true] %s252
          %255 = dma.hbm_to_vmem [thread:$0]  %s250, 128, %s253, %s242
        $region24: #{tpu_custom_call.1} parent=15 // pred_fallthru
          _
        // Predicated region
        $region25: #{tpu_custom_call.1} parent=15 // pred_check
          %p256 = pneg %p110
        $region26: #{tpu_custom_call.1} parent=15 // pred_check_branch
          %258 = sbr.rel (%p256) target = $region28
        $region27: #{tpu_custom_call.1} parent=15 // pred_region
          %s259 = sand.u32 %s24, 1
          %s260 = scalar_lea.sflag [#allocation6], %s259
          %s261 = sand.u32 %s100, 1
          %s262 = smul.addr %s261, 8
          %s263 = scalar_lea.vmem [#allocation7], %s262
          %s265 = ssub.s32 128, 128
          %266 = vsyncadd %s260, %s265
          %s267 = smul.addr %s31, 128
          %s268 = scalar_lea.hbm %s2, %s267
          %s270 = sshll.u32 %s263, 4
          %s271 = int_to_ptr.vmem [resolvable:$true] %s270
          %273 = dma.hbm_to_vmem [thread:$0]  %s268, 128, %s271, %s260
        $region28: #{tpu_custom_call.1} parent=15 // pred_fallthru
          _
        // Predicated region
        $region29: #{tpu_custom_call.1} parent=15 // pred_check
          %p274 = pneg %p138
        $region30: #{tpu_custom_call.1} parent=15 // pred_check_branch
          %276 = sbr.rel (%p274) target = $region32
        $region31: #{tpu_custom_call.1} parent=15 // pred_region
          %p277 = scmp.lt.s32.totalorder %s31, 1
          %s278 = scalar_select %p277, %s31, 1
          %p279 = scmp.lt.s32.totalorder %s32, 0
          %s280 = scalar_select %p279, %s32, 0
          %s281 = sadd.s32 %s280, %s278
          %s282 = smul.addr %s281, 2
          %s283 = scalar_lea.vmem %s3, %s282
        $region32: #{tpu_custom_call.1} parent=15 // pred_fallthru
          _
      $region16: #{tpu_custom_call.1} parent=5 // pred_fallthru
        _
      %p284 = scmp.le.s32.totalorder 1, %s24
      %p285 = scmp.lt.s32.totalorder %s24, 3
      %p286 = pnand %p284, %p285
      %p287 = pneg %p286
      // Predicated region
      $region33: #{tpu_custom_call.1} parent=5 // pred_check
        _
      $region34: #{tpu_custom_call.1} parent=5 // pred_check_branch
        %289 = sbr.rel (%p286) target = $region36
      $region35: #{tpu_custom_call.1} parent=5 // pred_region
        %s290 = ssub.s32 %s24, 1
        %s291 = sand.u32 %s51, 1
        %s292 = scalar_lea.sflag [#allocation3], %s291
        %s293 = sand.u32 %s51, 1
        %s294 = smul.addr %s293, 8
        %s295 = scalar_lea.vmem [#allocation2], %s294
        // Predicated region
        $region37: #{tpu_custom_call.1} parent=35 // pred_check
          %p296 = pneg %p64
        $region38: #{tpu_custom_call.1} parent=35 // pred_check_branch
          %298 = sbr.rel (%p296) target = $region40
        $region39: #{tpu_custom_call.1} parent=35 // pred_region
          %299 = dma.done %s292, 128
        $region40: #{tpu_custom_call.1} parent=35 // pred_fallthru
          _
        %s300 = sand.u32 %s29, 1
        %s301 = scalar_lea.sflag [#allocation6], %s300
        %s302 = sand.u32 %s77, 1
        %s303 = smul.addr %s302, 8
        %s304 = scalar_lea.vmem [#allocation5], %s303
        // Predicated region
        $region41: #{tpu_custom_call.1} parent=35 // pred_check
          %p305 = pneg %p90
        $region42: #{tpu_custom_call.1} parent=35 // pred_check_branch
          %307 = sbr.rel (%p305) target = $region44
        $region43: #{tpu_custom_call.1} parent=35 // pred_region
          %308 = dma.done %s301, 128
        $region44: #{tpu_custom_call.1} parent=35 // pred_fallthru
          _
        %s309 = sand.u32 %s29, 1
        %s310 = scalar_lea.sflag [#allocation6], %s309
        %s311 = sand.u32 %s103, 1
        %s312 = smul.addr %s311, 8
        %s313 = scalar_lea.vmem [#allocation7], %s312
        // Predicated region
        $region45: #{tpu_custom_call.1} parent=35 // pred_check
          %p314 = pneg %p116
        $region46: #{tpu_custom_call.1} parent=35 // pred_check_branch
          %316 = sbr.rel (%p314) target = $region48
        $region47: #{tpu_custom_call.1} parent=35 // pred_region
          %317 = dma.done %s310, 128
        $region48: #{tpu_custom_call.1} parent=35 // pred_fallthru
          _
        %s318 = sand.u32 %s51, 1
        %s319 = scalar_lea.sflag [#allocation3], %s318
        %s320 = sand.u32 %s51, 1
        %s321 = smul.addr %s320, 8
        %s322 = scalar_lea.vmem [#allocation2], %s321
        %p323 = pneg %p64
        %p324 = pneg %p61
        %s325 = sand.u32 %s29, 1
        %s326 = scalar_lea.sflag [#allocation6], %s325
        %s327 = sand.u32 %s77, 1
        %s328 = smul.addr %s327, 8
        %s329 = scalar_lea.vmem [#allocation5], %s328
        %p330 = pneg %p90
        %p331 = pneg %p87
        %s332 = sand.u32 %s29, 1
        %s333 = scalar_lea.sflag [#allocation6], %s332
        %s334 = sand.u32 %s103, 1
        %s335 = smul.addr %s334, 8
        %s336 = scalar_lea.vmem [#allocation7], %s335
        %p337 = pneg %p116
        %p338 = pneg %p113
        %p339 = scmp.lt.s32.totalorder %s33, 1
        %s340 = scalar_select %p339, %s33, 1
        %p341 = scmp.lt.s32.totalorder %s34, 0
        %s342 = scalar_select %p341, %s34, 0
        %s343 = sadd.s32 %s342, %s340
        %s344 = smul.addr %s343, 2
        %s345 = scalar_lea.vmem %s3, %s344
        %p346 = pneg %p144
        %p347 = pneg %p141
        %p348 = pneg %p172
        %p349 = pneg %p169
        %s350 = sand.u32 %s159, 1
        %s351 = scalar_lea.sflag [#allocation4], %s350
        %s352 = sand.u32 %s159, 1
        %s353 = smul.addr %s352, 8
        %s354 = scalar_lea.vmem [#allocation8], %s353
        %p355 = pneg %p200
        %p356 = pneg %p197
        %s357 = sand.u32 %s187, 1
        %s358 = scalar_lea.sflag [#allocation10], %s357
        %s359 = sand.u32 %s187, 1
        %s360 = smul.addr %s359, 8
        %s361 = scalar_lea.vmem [#allocation9], %s360
        %p362 = scmp.lt.s32.totalorder %s33, 1
        %s363 = scalar_select %p362, %s33, 1
        %p364 = scmp.lt.s32.totalorder %s34, 0
        %s365 = scalar_select %p364, %s34, 0
        %s366 = sadd.s32 %s365, %s363
        %s367 = smul.addr %s366, 2
        %s368 = scalar_lea.vmem %s3, %s367
        %v371 = vld [vmem:[%s304] sm:$0xff]
        %v372 = vld [vmem:[%s313] sm:$0xff]
        %v373 = vld [vmem:[%s295] sm:$0xff]
        %v374 = vmul.f32 %v373, 0.17677669
        %vm375 = vcmask 261120
        %v377 = vsel %vm375, %v374, 0
        %v380 = vsel %vm375, %v371, 0
        %382 = vmatprep.subr.mxu0 0.0
        %383 = vmatpush1.xpose.msra.mxu0 0.0
        %384 = vmatprep.subr.mxu0 0.0
        %385 = vmatpush1.xpose.msra.mxu0 0.0
        %386 = vmatprep.subr.mxu0 0.0
        %387 = vmatpush1.xpose.msra.mxu0 0.0
        %388 = vmatprep.subr.mxu0 0.0
        %389 = vmatpush1.xpose.msra.mxu0 0.0
        %390 = vmatprep.subr.mxu0 0.0
        %391 = vmatpush1.xpose.msra.mxu0 0.0
        %392 = vmatprep.subr.mxu0 0.0
        %393 = vmatpush1.xpose.msra.mxu0 0.0
        %394 = vmatprep.subr.mxu0 0.0
        %395 = vmatpush1.xpose.msra.mxu0 0.0
        %396 = vmatprep.subr.mxu0 0.0
        %397 = vmatpush1.xpose.msra.mxu0 0.0
        %398 = vmatprep.subr.mxu0 0.0
        %399 = vmatpush1.xpose.msra.mxu0 0.0
        %400 = vmatprep.subr.mxu0 0.0
        %401 = vmatpush1.xpose.msra.mxu0 0.0
        %402 = vmatprep.subr.mxu0 0.0
        %403 = vmatpush1.xpose.msra.mxu0 0.0
        %404 = vmatprep.subr.mxu0 0.0
        %405 = vmatpush1.xpose.msra.mxu0 0.0
        %406 = vmatprep.subr.mxu0 0.0
        %407 = vmatpush1.xpose.msra.mxu0 0.0
        %408 = vmatprep.subr.mxu0 0.0
        %409 = vmatpush1.xpose.msra.mxu0 0.0
        %410 = vmatprep.subr.mxu0 0.0
        %411 = vmatpush1.xpose.msra.mxu0 0.0
        %412 = vmatprep.subr.mxu0 0.0
        %413 = vmatpush1.xpose.msra.mxu0 %v380
        %414 = vmatprep.subr.mxu0 0.0
        %415 = vmatpush2.xpose.msra.mxu0 0.0
        %416 = vmatprep.subr.mxu0 0.0
        %417 = vmatpush2.xpose.msra.mxu0 0.0
        %418 = vmatprep.subr.mxu0 0.0
        %419 = vmatpush2.xpose.msra.mxu0 0.0
        %420 = vmatprep.subr.mxu0 0.0
        %421 = vmatpush2.xpose.msra.mxu0 0.0
        %422 = vmatprep.subr.mxu0 0.0
        %423 = vmatpush2.xpose.msra.mxu0 0.0
        %424 = vmatprep.subr.mxu0 0.0
        %425 = vmatpush2.xpose.msra.mxu0 0.0
        %426 = vmatprep.subr.mxu0 0.0
        %427 = vmatpush2.xpose.msra.mxu0 0.0
        %428 = vmatprep.subr.mxu0 0.0
        %429 = vmatpush2.xpose.msra.mxu0 0.0
        %430 = vmatprep.subr.mxu0 0.0
        %431 = vmatpush2.xpose.msra.mxu0 0.0
        %432 = vmatprep.subr.mxu0 0.0
        %433 = vmatpush2.xpose.msra.mxu0 0.0
        %434 = vmatprep.subr.mxu0 0.0
        %435 = vmatpush2.xpose.msra.mxu0 0.0
        %436 = vmatprep.subr.mxu0 0.0
        %437 = vmatpush2.xpose.msra.mxu0 0.0
        %438 = vmatprep.subr.mxu0 0.0
        %439 = vmatpush2.xpose.msra.mxu0 0.0
        %440 = vmatprep.subr.mxu0 0.0
        %441 = vmatpush2.xpose.msra.mxu0 0.0
        %442 = vmatprep.subr.mxu0 0.0
        %443 = vmatpush2.xpose.msra.mxu0 0.0
        %444 = vmatprep.subr.mxu0 0.0
        %445 = vmatpush2.xpose.msra.mxu0 0.0
        %446 = vmatprep.mubr.f32.mxu0 0.0
        %447 = vmatmul.mubr.f32.gmra.mxu0 %v377
        %v448 = vpop.f32.mrf.mxu0
        %v449 = vadd.f32 0.0, %v448
        %v450 = vpop.f32.mrf.mxu0
        %451 = vdwg.mxu0
        %v452 = vld [vmem:[%s368] sm:$0x3]
        %vm453 = vnez %v452
        %v454 = vsel %vm453, 16843009, 0
        %v455 = vunpack.c.0.s8 %v454
        %vm456 = vcmp.ne.s32.totalorder %v455, 0
        %v457 = vsel %vm456, -1e+30, %v449
        %vm458 = vcmask 64512
        %v459 = vsel %vm458, %v457, -inf
        %460 = vmax.xlane.f32.xlu0 %v459
        %v461 = vpop.xlane.xlu0 %460
        %v462 = vsub.f32 %v457, %v461
        %v463 = vmul.f32 %v462, 1.442695
        %v464 = vpow.pop %v463
        %v465 = vsel %vm458, %v464, 0.0
        %466 = vadd.xlane.f32.xlu0 %v465
        %v467 = vpop.xlane.xlu0 %466
        %v468 = vrcp.pop %v467
        %v469 = vmul.f32 %v464, %v468
        %470 = vst.msk [vmem:[%s361] sm:$0xff] %vm458, %v469
        %v472 = vsel %vm458, %v469, 0
        %474 = vmatprep.subr.mxu0 0.0
        %475 = vmatpush1.msra.mxu0 0.0
        %476 = vmatprep.subr.mxu0 0.0
        %477 = vmatpush1.msra.mxu0 0.0
        %478 = vmatprep.subr.mxu0 0.0
        %479 = vmatpush1.msra.mxu0 0.0
        %480 = vmatprep.subr.mxu0 0.0
        %481 = vmatpush1.msra.mxu0 0.0
        %482 = vmatprep.subr.mxu0 0.0
        %483 = vmatpush1.msra.mxu0 0.0
        %484 = vmatprep.subr.mxu0 0.0
        %485 = vmatpush1.msra.mxu0 0.0
        %486 = vmatprep.subr.mxu0 0.0
        %487 = vmatpush1.msra.mxu0 0.0
        %488 = vmatprep.subr.mxu0 0.0
        %489 = vmatpush1.msra.mxu0 0.0
        %490 = vmatprep.subr.mxu0 0.0
        %491 = vmatpush1.msra.mxu0 0.0
        %492 = vmatprep.subr.mxu0 0.0
        %493 = vmatpush1.msra.mxu0 0.0
        %494 = vmatprep.subr.mxu0 0.0
        %495 = vmatpush1.msra.mxu0 0.0
        %496 = vmatprep.subr.mxu0 0.0
        %497 = vmatpush1.msra.mxu0 0.0
        %498 = vmatprep.subr.mxu0 0.0
        %499 = vmatpush1.msra.mxu0 0.0
        %500 = vmatprep.subr.mxu0 0.0
        %501 = vmatpush1.msra.mxu0 0.0
        %502 = vmatprep.subr.mxu0 0.0
        %503 = vmatpush1.msra.mxu0 0.0
        %504 = vmatprep.subr.mxu0 0.0
        %505 = vmatpush1.msra.mxu0 %v372
        %506 = vmatprep.subr.mxu0 0.0
        %507 = vmatpush2.msra.mxu0 0.0
        %508 = vmatprep.subr.mxu0 0.0
        %509 = vmatpush2.msra.mxu0 0.0
        %510 = vmatprep.subr.mxu0 0.0
        %511 = vmatpush2.msra.mxu0 0.0
        %512 = vmatprep.subr.mxu0 0.0
        %513 = vmatpush2.msra.mxu0 0.0
        %514 = vmatprep.subr.mxu0 0.0
        %515 = vmatpush2.msra.mxu0 0.0
        %516 = vmatprep.subr.mxu0 0.0
        %517 = vmatpush2.msra.mxu0 0.0
        %518 = vmatprep.subr.mxu0 0.0
        %519 = vmatpush2.msra.mxu0 0.0
        %520 = vmatprep.subr.mxu0 0.0
        %521 = vmatpush2.msra.mxu0 0.0
        %522 = vmatprep.subr.mxu0 0.0
        %523 = vmatpush2.msra.mxu0 0.0
        %524 = vmatprep.subr.mxu0 0.0
        %525 = vmatpush2.msra.mxu0 0.0
        %526 = vmatprep.subr.mxu0 0.0
        %527 = vmatpush2.msra.mxu0 0.0
        %528 = vmatprep.subr.mxu0 0.0
        %529 = vmatpush2.msra.mxu0 0.0
        %530 = vmatprep.subr.mxu0 0.0
        %531 = vmatpush2.msra.mxu0 0.0
        %532 = vmatprep.subr.mxu0 0.0
        %533 = vmatpush2.msra.mxu0 0.0
        %534 = vmatprep.subr.mxu0 0.0
        %535 = vmatpush2.msra.mxu0 0.0
        %536 = vmatprep.subr.mxu0 0.0
        %537 = vmatpush2.msra.mxu0 0.0
        %538 = vmatprep.mubr.f32.mxu0 0.0
        %539 = vmatmul.mubr.f32.gmra.mxu0 %v472
        %v540 = vpop.f32.mrf.mxu0
        %v541 = vadd.f32 0.0, %v540
        %v542 = vpop.f32.mrf.mxu0
        %543 = vdwg.mxu0
        %544 = vst.msk [vmem:[%s354] sm:$0xff] %vm375, %v541
        %s545 = sand.u32 %s159, 1
        %s546 = scalar_lea.sflag [#allocation4], %s545
        %s547 = sand.u32 %s159, 1
        %s548 = smul.addr %s547, 8
        %s549 = scalar_lea.vmem [#allocation8], %s548
        %s550 = sand.u32 %s187, 1
        %s551 = scalar_lea.sflag [#allocation10], %s550
        %s552 = sand.u32 %s187, 1
        %s553 = smul.addr %s552, 8
        %s554 = scalar_lea.vmem [#allocation9], %s553
        // Predicated region
        $region49: #{tpu_custom_call.1} parent=35 // pred_check
          %p555 = pneg %p169
        $region50: #{tpu_custom_call.1} parent=35 // pred_check_branch
          %557 = sbr.rel (%p555) target = $region52
        $region51: #{tpu_custom_call.1} parent=35 // pred_region
          %s559 = ssub.s32 128, 128
          %560 = vsyncadd %s546, %s559
          %s561 = sadd.s32 %s34, %s33
          %s562 = smul.addr %s561, 128
          %s563 = scalar_lea.hbm %s4, %s562
          %s565 = sshll.u32 %s549, 4
          %s566 = int_to_ptr.vmem [resolvable:$true] %s565
          %568 = dma.vmem_to_hbm [thread:$0]  %s566, 128, %s563, %s546
        $region52: #{tpu_custom_call.1} parent=35 // pred_fallthru
          _
        // Predicated region
        $region53: #{tpu_custom_call.1} parent=35 // pred_check
          %p569 = pneg %p197
        $region54: #{tpu_custom_call.1} parent=35 // pred_check_branch
          %571 = sbr.rel (%p569) target = $region56
        $region55: #{tpu_custom_call.1} parent=35 // pred_region
          %s573 = ssub.s32 128, 128
          %574 = vsyncadd %s551, %s573
          %s575 = sadd.s32 %s34, %s33
          %s576 = smul.addr %s575, 128
          %s577 = scalar_lea.hbm %s5, %s576
          %s579 = sshll.u32 %s554, 4
          %s580 = int_to_ptr.vmem [resolvable:$true] %s579
          %582 = dma.vmem_to_hbm [thread:$0]  %s580, 128, %s577, %s551
        $region56: #{tpu_custom_call.1} parent=35 // pred_fallthru
          _
      $region36: #{tpu_custom_call.1} parent=5 // pred_fallthru
        _
      %p583 = scmp.le.s32.totalorder 2, %s24
      // Predicated region
      $region57: #{tpu_custom_call.1} parent=5 // pred_check
        %p584 = pneg %p583
      $region58: #{tpu_custom_call.1} parent=5 // pred_check_branch
        %586 = sbr.rel (%p584) target = $region60
      $region59: #{tpu_custom_call.1} parent=5 // pred_region
        %s587 = ssub.s32 %s24, 2
        // Predicated region
        $region61: #{tpu_custom_call.1} parent=59 // pred_check
          %p588 = pneg %p175
        $region62: #{tpu_custom_call.1} parent=59 // pred_check_branch
          %590 = sbr.rel (%p588) target = $region64
        $region63: #{tpu_custom_call.1} parent=59 // pred_region
          %s591 = sand.u32 %s160, 1
          %s592 = scalar_lea.sflag [#allocation4], %s591
          %s593 = sand.u32 %s160, 1
          %s594 = smul.addr %s593, 8
          %s595 = scalar_lea.vmem [#allocation8], %s594
          %596 = dma.done %s592, 128
        $region64: #{tpu_custom_call.1} parent=59 // pred_fallthru
          _
        // Predicated region
        $region65: #{tpu_custom_call.1} parent=59 // pred_check
          %p597 = pneg %p203
        $region66: #{tpu_custom_call.1} parent=59 // pred_check_branch
          %599 = sbr.rel (%p597) target = $region68
        $region67: #{tpu_custom_call.1} parent=59 // pred_region
          %s600 = sand.u32 %s188, 1
          %s601 = scalar_lea.sflag [#allocation10], %s600
          %s602 = sand.u32 %s188, 1
          %s603 = smul.addr %s602, 8
          %s604 = scalar_lea.vmem [#allocation9], %s603
          %605 = dma.done %s601, 128
        $region68: #{tpu_custom_call.1} parent=59 // pred_fallthru
          _
      $region60: #{tpu_custom_call.1} parent=5 // pred_fallthru
        _
    $region6: #{tpu_custom_call.1} parent=1 // loop_footer
      %s28 = sadd.s32 1, %s24
    $region7: #{tpu_custom_call.1} parent=1 // loop_footer_branch
      %23 = sbr.rel target = $region3
    $region8: #{tpu_custom_call.1} parent=1 // loop_exit
      _
    %606 = vsyncpa [#allocation3], 1
    %s607 = scalar_lea.sflag [#allocation3], 1
    %608 = vsyncpa %s607, 1
    %609 = vsyncpa [#allocation6], 1
    %s610 = scalar_lea.sflag [#allocation6], 1
    %611 = vsyncpa %s610, 1
    %612 = vsyncpa [#allocation4], 1
    %s613 = scalar_lea.sflag [#allocation4], 1
    %614 = vsyncpa %s613, 1
    %615 = vsyncpa [#allocation10], 1
    %s616 = scalar_lea.sflag [#allocation10], 1
    %617 = vsyncpa %s616, 1

</llo_original>
